<compile_context>
chip_gen: v7x
topology: tpu7x:2x2x1
jax: 0.10.0
libtpu: 0.0.40
codegen_flags: <defaults>
</compile_context>

<pallas_src>
import functools
import math

import jax
import jax.numpy as jnp
from jax.experimental import pallas as pl
from jax.experimental.pallas import tpu as pltpu

LANE = 128
MAX_TILE_ROWS = 1024          # measured: ~86% of HBM roofline at 1024 rows
VMEM_BUDGET = 8 * 1024 * 1024  # double-buffered in+out footprint; safe on v5e/v6e/v7x


def _isru_kernel(*refs, n, c_):
    """refs = (x_0..x_{n-1}, o_0..o_{n-1}); each block is (tile, 128) in VMEM."""
    x_refs = refs[:n]
    o_refs = refs[n:]

    # Pass 1: accumulate sum of squares in f32 (one streaming vreg per input).
    acc = None
    for i in range(n):
        xi = x_refs[i][...].astype(jnp.float32)
        sq = xi * xi
        acc = sq if acc is None else acc + sq

    inv_denom = jax.lax.rsqrt(acc + jnp.float32(c_))  # EUP rsqrt

    # Pass 2: re-read each input from VMEM (cheap) and scale.
    for i in range(n):
        xi = x_refs[i][...].astype(jnp.float32)
        o_refs[i][...] = (xi * inv_denom).astype(o_refs[i].dtype)


def isru(tensor_list, c_=1e-9):
    """Pallas ISRU: out_i = x_i / sqrt(sum_j x_j^2 + c), returned as a list."""
    n = len(tensor_list)
    assert n >= 1
    shape = tensor_list[0].shape
    dtype = tensor_list[0].dtype
    for t in tensor_list:
        assert t.shape == shape and t.dtype == dtype

    numel = math.prod(shape) if shape else 1
    itemsize = jnp.dtype(dtype).itemsize
    # Native sublane tile: 8 rows (f32), 16 (bf16), 32 (int8).
    sub = max(8, 32 // max(itemsize, 1))

    rows = pl.cdiv(numel, LANE)
    rows_p = pl.cdiv(rows, sub) * sub          # sublane-aligned row count
    padded_numel = rows_p * LANE

    # Tile rows: as large as possible while keeping double-buffered in+out
    # (4 copies of n blocks) under the conservative VMEM budget.
    t_budget = VMEM_BUDGET // (4 * n * LANE * itemsize)
    tile = min(MAX_TILE_ROWS, (t_budget // sub) * sub, rows_p)
    tile = max(tile, sub)

    grid = (pl.cdiv(rows_p, tile),)

    def flat2d(t):
        f = t.reshape(-1)
        if padded_numel != numel:
            f = jnp.pad(f, (0, padded_numel - numel))
        return f.reshape(rows_p, LANE)

    xs = [flat2d(t) for t in tensor_list]

    kernel = functools.partial(_isru_kernel, n=n, c_=float(c_))
    spec = pl.BlockSpec((tile, LANE), lambda r: (r, 0))

    outs = pl.pallas_call(
        kernel,
        out_shape=tuple(
            jax.ShapeDtypeStruct((rows_p, LANE), dtype) for _ in range(n)
        ),
        grid_spec=pltpu.PrefetchScalarGridSpec(
            num_scalar_prefetch=0,
            grid=grid,
            in_specs=tuple(spec for _ in range(n)),
            out_specs=tuple(spec for _ in range(n)),
        ),
        compiler_params=pltpu.CompilerParams(
            dimension_semantics=("parallel",),
        ),
    )(*xs)

    def unflat(o):
        if padded_numel != numel:
            o = o.reshape(-1)[:numel]
        return o.reshape(shape)

    return [unflat(o) for o in outs]


def _isru_ref(tensor_list, c_=1e-9):
    denom = jnp.zeros_like(tensor_list[0])
    for t in tensor_list:
        denom = denom + t * t
    denom = jnp.sqrt(denom + jnp.asarray(c_, tensor_list[0].dtype))
    return [t / denom for t in tensor_list]


if __name__ == "__main__":
    key = jax.random.PRNGKey(0)
    k1, k2, k3 = jax.random.split(key, 3)
    # Three NCHW tensors, batch=2, channels=4, spatial=16x16.
    x1 = jax.random.normal(k1, (2, 4, 16, 16), dtype=jnp.float32)
    x2 = jax.random.normal(k2, (2, 4, 16, 16), dtype=jnp.float32)
    x3 = jax.random.normal(k3, (2, 4, 16, 16), dtype=jnp.float32)
    inputs = [x1, x2, x3]

    outs = isru(inputs, c_=1e-9)
    outs = jax.block_until_ready(outs)

    refs = _isru_ref(inputs, c_=1e-9)
    for o, r in zip(outs, refs):
        assert o.shape == r.shape
        assert jnp.allclose(o, r, atol=1e-5, rtol=1e-5)

    print("KERNEL_OK")
</pallas_src>

<mosaic_0001>
module attributes {stable_mosaic.version = 11 : i64} {
  func.func @_isru_kernel(%arg0: i32, %arg1: memref<16x128xf32, #tpu.memory_space<vmem>>, %arg2: memref<16x128xf32, #tpu.memory_space<vmem>>, %arg3: memref<16x128xf32, #tpu.memory_space<vmem>>, %arg4: memref<16x128xf32, #tpu.memory_space<vmem>>, %arg5: memref<16x128xf32, #tpu.memory_space<vmem>>, %arg6: memref<16x128xf32, #tpu.memory_space<vmem>>) attributes {dimension_semantics = [#tpu.dimension_semantics<parallel>], iteration_bounds = array<i64: 1>, scalar_prefetch = 0 : i64, scratch_operands = 0 : i64, tpu.core_type = #tpu.core_type<tc>, window_params = [{transform_indices = @transform_0, window_bounds = array<i64: 16, 128>}, {transform_indices = @transform_1, window_bounds = array<i64: 16, 128>}, {transform_indices = @transform_2, window_bounds = array<i64: 16, 128>}, {transform_indices = @transform_3, window_bounds = array<i64: 16, 128>}, {transform_indices = @transform_4, window_bounds = array<i64: 16, 128>}, {transform_indices = @transform_5, window_bounds = array<i64: 16, 128>}]} {
    %c0 = arith.constant 0 : index
    %c0_0 = arith.constant 0 : index
    %0 = vector.load %arg1[%c0, %c0_0] : memref<16x128xf32, #tpu.memory_space<vmem>>, vector<16x128xf32>
    %1 = arith.mulf %0, %0 : vector<16x128xf32>
    %c0_1 = arith.constant 0 : index
    %c0_2 = arith.constant 0 : index
    %2 = vector.load %arg2[%c0_1, %c0_2] : memref<16x128xf32, #tpu.memory_space<vmem>>, vector<16x128xf32>
    %3 = arith.mulf %2, %2 : vector<16x128xf32>
    %4 = arith.addf %1, %3 : vector<16x128xf32>
    %c0_3 = arith.constant 0 : index
    %c0_4 = arith.constant 0 : index
    %5 = vector.load %arg3[%c0_3, %c0_4] : memref<16x128xf32, #tpu.memory_space<vmem>>, vector<16x128xf32>
    %6 = arith.mulf %5, %5 : vector<16x128xf32>
    %7 = arith.addf %4, %6 : vector<16x128xf32>
    %cst = arith.constant 9.99999971E-10 : f32
    %8 = vector.broadcast %cst : f32 to vector<16x128xf32>
    %9 = arith.addf %7, %8 : vector<16x128xf32>
    %10 = math.rsqrt %9 : vector<16x128xf32>
    %c0_5 = arith.constant 0 : index
    %c0_6 = arith.constant 0 : index
    %11 = vector.load %arg1[%c0_5, %c0_6] : memref<16x128xf32, #tpu.memory_space<vmem>>, vector<16x128xf32>
    %12 = arith.mulf %11, %10 : vector<16x128xf32>
    %c0_7 = arith.constant 0 : index
    %c0_8 = arith.constant 0 : index
    %13 = vector.load %arg4[%c0_7, %c0_8] : memref<16x128xf32, #tpu.memory_space<vmem>>, vector<16x128xf32>
    tpu.vector_store %arg4[%c0_7, %c0_8], %12 {strides = array<i32>} : memref<16x128xf32, #tpu.memory_space<vmem>>, vector<16x128xf32>,
    %c0_9 = arith.constant 0 : index
    %c0_10 = arith.constant 0 : index
    %14 = vector.load %arg2[%c0_9, %c0_10] : memref<16x128xf32, #tpu.memory_space<vmem>>, vector<16x128xf32>
    %15 = arith.mulf %14, %10 : vector<16x128xf32>
    %c0_11 = arith.constant 0 : index
    %c0_12 = arith.constant 0 : index
    %16 = vector.load %arg5[%c0_11, %c0_12] : memref<16x128xf32, #tpu.memory_space<vmem>>, vector<16x128xf32>
    tpu.vector_store %arg5[%c0_11, %c0_12], %15 {strides = array<i32>} : memref<16x128xf32, #tpu.memory_space<vmem>>, vector<16x128xf32>,
    %c0_13 = arith.constant 0 : index
    %c0_14 = arith.constant 0 : index
    %17 = vector.load %arg3[%c0_13, %c0_14] : memref<16x128xf32, #tpu.memory_space<vmem>>, vector<16x128xf32>
    %18 = arith.mulf %17, %10 : vector<16x128xf32>
    %c0_15 = arith.constant 0 : index
    %c0_16 = arith.constant 0 : index
    %19 = vector.load %arg6[%c0_15, %c0_16] : memref<16x128xf32, #tpu.memory_space<vmem>>, vector<16x128xf32>
    tpu.vector_store %arg6[%c0_15, %c0_16], %18 {strides = array<i32>} : memref<16x128xf32, #tpu.memory_space<vmem>>, vector<16x128xf32>,
    return
  }
  func.func @transform_0(%arg0: i32) -> (i32, i32) {
    %c0_i32 = arith.constant 0 : i32
    %c0_i32_0 = arith.constant 0 : i32
    return %arg0, %c0_i32 : i32, i32
  }
  func.func @transform_1(%arg0: i32) -> (i32, i32) {
    %c0_i32 = arith.constant 0 : i32
    %c0_i32_0 = arith.constant 0 : i32
    return %arg0, %c0_i32 : i32, i32
  }
  func.func @transform_2(%arg0: i32) -> (i32, i32) {
    %c0_i32 = arith.constant 0 : i32
    %c0_i32_0 = arith.constant 0 : i32
    return %arg0, %c0_i32 : i32, i32
  }
  func.func @transform_3(%arg0: i32) -> (i32, i32) {
    %c0_i32 = arith.constant 0 : i32
    %c0_i32_0 = arith.constant 0 : i32
    return %arg0, %c0_i32 : i32, i32
  }
  func.func @transform_4(%arg0: i32) -> (i32, i32) {
    %c0_i32 = arith.constant 0 : i32
    %c0_i32_0 = arith.constant 0 : i32
    return %arg0, %c0_i32 : i32, i32
  }
  func.func @transform_5(%arg0: i32) -> (i32, i32) {
    %c0_i32 = arith.constant 0 : i32
    %c0_i32_0 = arith.constant 0 : i32
    return %arg0, %c0_i32 : i32, i32
  }
}

</mosaic_0001>

<llo_original>
// kernel: tpu_custom_call.1
$region0: #{tpu_custom_call.1}
  #allocation0 [shape = 'u32[]', space=smem, size = 0x4, offset = 0x4, fixed_abs, tag = 'smem constant byte address 0x4 - core index']
  #allocation1 [shape = 'u32[144,128]{1,0:T(1,128)}', space=vmem, size = 0x12000, scoped, tag = 'internal scratch']
  %s0 = inlined_call_operand.hbm [shape: f32[16,128], index: 0, kind: input, shape index: {}]
  %s1 = inlined_call_operand.hbm [shape: f32[16,128], index: 1, kind: input, shape index: {}]
  %s2 = inlined_call_operand.hbm [shape: f32[16,128], index: 2, kind: input, shape index: {}]
  %s3 = inlined_call_operand.hbm [shape: f32[16,128], index: 3, kind: output, shape index: {0}]
  %s4 = inlined_call_operand.hbm [shape: f32[16,128], index: 4, kind: output, shape index: {1}]
  %s5 = inlined_call_operand.hbm [shape: f32[16,128], index: 5, kind: output, shape index: {2}]
  %6 = xla_tuple %s3, %s4, %s5
  %s7 = sld [smem:[#allocation0]]
  $region50: #{tpu_custom_call.1} parent=0
    _
  %s9 = ssub.s32 1, %s7
  %s10 = scalar_select 0, %s9, %s7
  $region1: #{tpu_custom_call.1} parent=0
    #allocation2 [shape = 'u8[8192]{0}', space=vmem, size = 0x2000, scoped, tag = 'input window, operand 0, single buffered']
    #allocation3 [shape = 's32[1]{0}', space=sflag, size = 0x4, scoped, tag = 'scoped memory for tpu_custom_call.1']
    #allocation4 [shape = 's32[1]{0}', space=sflag, size = 0x4, scoped, tag = 'scoped memory for tpu_custom_call.1']
    #allocation5 [shape = 'u8[8192]{0}', space=vmem, size = 0x2000, scoped, tag = 'input window, operand 1, single buffered']
    #allocation6 [shape = 's32[1]{0}', space=sflag, size = 0x4, scoped, tag = 'scoped memory for tpu_custom_call.1']
    #allocation7 [shape = 'u8[8192]{0}', space=vmem, size = 0x2000, scoped, tag = 'input window, operand 2, single buffered']
    #allocation8 [shape = 'u8[8192]{0}', space=vmem, size = 0x2000, scoped, tag = 'output window, operand 0, single buffered']
    #allocation9 [shape = 'u8[8192]{0}', space=vmem, size = 0x2000, scoped, tag = 'output window, operand 1, single buffered']
    #allocation10 [shape = 's32[1]{0}', space=sflag, size = 0x4, scoped, tag = 'scoped memory for tpu_custom_call.1']
    #allocation11 [shape = 'u8[8192]{0}', space=vmem, size = 0x2000, scoped, tag = 'output window, operand 2, single buffered']
    %11 = vsyncpa [#allocation3], 0
    %12 = vsyncpa [#allocation6], 0
    %13 = vsyncpa [#allocation4], 0
    %14 = vsyncpa [#allocation10], 0
    // Predicated region
    $region2: #{tpu_custom_call.1} parent=1 // pred_check
      _
    $region3: #{tpu_custom_call.1} parent=1 // pred_check_branch
      %16 = sbr.rel (0) target = $region5
    $region4: #{tpu_custom_call.1} parent=1 // pred_region
      %s18 = ssub.s32 256, 256
      %19 = vsyncadd [#allocation3], %s18
      %s20 = sshll.u32 [#allocation2], 4
      %s21 = int_to_ptr.vmem [resolvable:$true] %s20
      %26 = dma.hbm_to_vmem [thread:$0]  %s0, 256, %s21, [#allocation3], 128, 128, 8
    $region5: #{tpu_custom_call.1} parent=1 // pred_fallthru
      _
    // Predicated region
    $region6: #{tpu_custom_call.1} parent=1 // pred_check
      _
    $region7: #{tpu_custom_call.1} parent=1 // pred_check_branch
      %28 = sbr.rel (0) target = $region9
    $region8: #{tpu_custom_call.1} parent=1 // pred_region
      %s30 = ssub.s32 256, 256
      %31 = vsyncadd [#allocation6], %s30
      %s32 = sshll.u32 [#allocation5], 4
      %s33 = int_to_ptr.vmem [resolvable:$true] %s32
      %38 = dma.hbm_to_vmem [thread:$0]  %s1, 256, %s33, [#allocation6], 128, 128, 8
    $region9: #{tpu_custom_call.1} parent=1 // pred_fallthru
      _
    // Predicated region
    $region10: #{tpu_custom_call.1} parent=1 // pred_check
      _
    $region11: #{tpu_custom_call.1} parent=1 // pred_check_branch
      %40 = sbr.rel (0) target = $region13
    $region12: #{tpu_custom_call.1} parent=1 // pred_region
      %s42 = ssub.s32 256, 256
      %43 = vsyncadd [#allocation6], %s42
      %s44 = sshll.u32 [#allocation7], 4
      %s45 = int_to_ptr.vmem [resolvable:$true] %s44
      %50 = dma.hbm_to_vmem [thread:$0]  %s2, 256, %s45, [#allocation6], 128, 128, 8
    $region13: #{tpu_custom_call.1} parent=1 // pred_fallthru
      _
    // Predicated region
    $region14: #{tpu_custom_call.1} parent=1 // pred_check
      _
    $region15: #{tpu_custom_call.1} parent=1 // pred_check_branch
      %52 = sbr.rel (0) target = $region17
    $region16: #{tpu_custom_call.1} parent=1 // pred_region
      %53 = dma.done [#allocation3], 256
    $region17: #{tpu_custom_call.1} parent=1 // pred_fallthru
      _
    // Predicated region
    $region18: #{tpu_custom_call.1} parent=1 // pred_check
      _
    $region19: #{tpu_custom_call.1} parent=1 // pred_check_branch
      %55 = sbr.rel (0) target = $region21
    $region20: #{tpu_custom_call.1} parent=1 // pred_region
      %56 = dma.done [#allocation6], 256
    $region21: #{tpu_custom_call.1} parent=1 // pred_fallthru
      _
    // Predicated region
    $region22: #{tpu_custom_call.1} parent=1 // pred_check
      _
    $region23: #{tpu_custom_call.1} parent=1 // pred_check_branch
      %58 = sbr.rel (0) target = $region25
    $region24: #{tpu_custom_call.1} parent=1 // pred_region
      %59 = dma.done [#allocation6], 256
    $region25: #{tpu_custom_call.1} parent=1 // pred_fallthru
      _
    %v60 = vld [vmem:[#allocation2] sm:$0xff]
    %v61 = vld [vmem:[#allocation2 + $0x8] sm:$0xff]
    %v62 = vmul.f32 %v60, %v60
    %v63 = vmul.f32 %v61, %v61
    %v64 = vld [vmem:[#allocation5] sm:$0xff]
    %v65 = vld [vmem:[#allocation5 + $0x8] sm:$0xff]
    %v66 = vmul.f32 %v64, %v64
    %v67 = vmul.f32 %v65, %v65
    %v68 = vadd.f32 %v62, %v66
    %v69 = vadd.f32 %v63, %v67
    %v70 = vld [vmem:[#allocation7] sm:$0xff]
    %v71 = vld [vmem:[#allocation7 + $0x8] sm:$0xff]
    %v72 = vmul.f32 %v70, %v70
    %v73 = vmul.f32 %v71, %v71
    %v74 = vadd.f32 %v68, %v72
    %v75 = vadd.f32 %v69, %v73
    %v76 = vadd.f32 %v74, 1e-09
    %v77 = vadd.f32 %v75, 1e-09
    %v78 = vrsqrt.pop %v76
    %v79 = vrsqrt.pop %v77
    %v80 = vmul.f32 %v60, %v78
    %v81 = vmul.f32 %v61, %v79
    %82 = vst [vmem:[#allocation8] sm:$0xff] %v80
    %83 = vst [vmem:[#allocation8 + $0x8] sm:$0xff] %v81
    %v84 = vld [vmem:[#allocation5] sm:$0xff]
    %v85 = vld [vmem:[#allocation5 + $0x8] sm:$0xff]
    %v86 = vmul.f32 %v84, %v78
    %v87 = vmul.f32 %v85, %v79
    %88 = vst [vmem:[#allocation9] sm:$0xff] %v86
    %89 = vst [vmem:[#allocation9 + $0x8] sm:$0xff] %v87
    %v90 = vld [vmem:[#allocation7] sm:$0xff]
    %v91 = vld [vmem:[#allocation7 + $0x8] sm:$0xff]
    %v92 = vmul.f32 %v90, %v78
    %v93 = vmul.f32 %v91, %v79
    %94 = vst [vmem:[#allocation11] sm:$0xff] %v92
    %95 = vst [vmem:[#allocation11 + $0x8] sm:$0xff] %v93
    // Predicated region
    $region26: #{tpu_custom_call.1} parent=1 // pred_check
      _
    $region27: #{tpu_custom_call.1} parent=1 // pred_check_branch
      %97 = sbr.rel (0) target = $region29
    $region28: #{tpu_custom_call.1} parent=1 // pred_region
      %s99 = ssub.s32 256, 256
      %100 = vsyncadd [#allocation4], %s99
      %s101 = sshll.u32 [#allocation8], 4
      %s102 = int_to_ptr.vmem [resolvable:$true] %s101
      %107 = dma.vmem_to_hbm [thread:$0]  %s102, 256, %s3, [#allocation4], 128, 128, 8
    $region29: #{tpu_custom_call.1} parent=1 // pred_fallthru
      _
    // Predicated region
    $region30: #{tpu_custom_call.1} parent=1 // pred_check
      _
    $region31: #{tpu_custom_call.1} parent=1 // pred_check_branch
      %109 = sbr.rel (0) target = $region33
    $region32: #{tpu_custom_call.1} parent=1 // pred_region
      %s111 = ssub.s32 256, 256
      %112 = vsyncadd [#allocation10], %s111
      %s113 = sshll.u32 [#allocation9], 4
      %s114 = int_to_ptr.vmem [resolvable:$true] %s113
      %119 = dma.vmem_to_hbm [thread:$0]  %s114, 256, %s4, [#allocation10], 128, 128, 8
    $region33: #{tpu_custom_call.1} parent=1 // pred_fallthru
      _
    // Predicated region
    $region34: #{tpu_custom_call.1} parent=1 // pred_check
      _
    $region35: #{tpu_custom_call.1} parent=1 // pred_check_branch
      %121 = sbr.rel (0) target = $region37
    $region36: #{tpu_custom_call.1} parent=1 // pred_region
      %s123 = ssub.s32 256, 256
      %124 = vsyncadd [#allocation10], %s123
      %s125 = sshll.u32 [#allocation11], 4
      %s126 = int_to_ptr.vmem [resolvable:$true] %s125
      %131 = dma.vmem_to_hbm [thread:$0]  %s126, 256, %s5, [#allocation10], 128, 128, 8
    $region37: #{tpu_custom_call.1} parent=1 // pred_fallthru
      _
    // Predicated region
    $region38: #{tpu_custom_call.1} parent=1 // pred_check
      _
    $region39: #{tpu_custom_call.1} parent=1 // pred_check_branch
      %133 = sbr.rel (0) target = $region41
    $region40: #{tpu_custom_call.1} parent=1 // pred_region
      %134 = dma.done [#allocation4], 256
    $region41: #{tpu_custom_call.1} parent=1 // pred_fallthru
      _
    // Predicated region
    $region42: #{tpu_custom_call.1} parent=1 // pred_check
      _
    $region43: #{tpu_custom_call.1} parent=1 // pred_check_branch
      %136 = sbr.rel (0) target = $region45
    $region44: #{tpu_custom_call.1} parent=1 // pred_region
      %137 = dma.done [#allocation10], 256
    $region45: #{tpu_custom_call.1} parent=1 // pred_fallthru
      _
    // Predicated region
    $region46: #{tpu_custom_call.1} parent=1 // pred_check
      _
    $region47: #{tpu_custom_call.1} parent=1 // pred_check_branch
      %139 = sbr.rel (0) target = $region49
    $region48: #{tpu_custom_call.1} parent=1 // pred_region
      %140 = dma.done [#allocation10], 256
    $region49: #{tpu_custom_call.1} parent=1 // pred_fallthru
      _
    %141 = vsyncpa [#allocation3], 1
    %142 = vsyncpa [#allocation6], 1
    %143 = vsyncpa [#allocation4], 1
    %144 = vsyncpa [#allocation10], 1

</llo_original>
